<compile_context>
chip_gen: v7x
topology: tpu7x:2x2x1
jax: 0.10.0
libtpu: 0.0.40
codegen_flags: <defaults>
</compile_context>

<pallas_src>
import jax
import jax.numpy as jnp
import numpy as np
from jax.experimental import pallas as pl
from jax.experimental.pallas import tpu as pltpu


# ---------------------------------------------------------------------------
# Phase B kernel: weighted sum over memory slots (streamed, lane-dense)
# ---------------------------------------------------------------------------
def weighted_sum_kernel(alpha_ref, sm_ref, out_ref):
    """out[b, rows, :] = sum_m alpha[b, m] * short_memory[b, m, rows, :].

    alpha_ref : SMEM (B*M,) f32  -- scalar reads, no lane-sparse VMEM tile
    sm_ref    : VMEM (1, M, tR, Lw) in short_memory's native dtype (Lw lane-dense)
    out_ref   : VMEM (1, tR, Lw)
    """
    b = pl.program_id(0)
    num_mem = sm_ref.shape[1]
    base = b * num_mem

    # VPU multiply-accumulate over the (small) memory-slot axis, f32 accumulation.
    acc = sm_ref[0, 0].astype(jnp.float32) * alpha_ref[base]
    for m in range(1, num_mem):
        acc = acc + sm_ref[0, m].astype(jnp.float32) * alpha_ref[base + m]

    out_ref[0] = acc.astype(out_ref.dtype)


# ---------------------------------------------------------------------------
# Phase A: attention weights in plain JAX (exact rearrangement of the module)
# ---------------------------------------------------------------------------
def _attention_weights(encoder_output, decoder_output, w, b):
    D = encoder_output.shape[-1]
    enc_mean = jnp.mean(encoder_output.astype(jnp.float32), axis=1)       # (B, D)
    dec_mean = jnp.mean(decoder_output.astype(jnp.float32), axis=1)       # (B, D)
    w1 = w[:, :D].astype(jnp.float32)                                     # (M, D)
    w2 = w[:, D:].astype(jnp.float32)                                     # (M, D)
    # mean(linear(cat(enc, dec))) == linear applied to the seq-means (exact).
    logits = enc_mean @ w1.T + dec_mean @ w2.T + b.astype(jnp.float32)    # (B, M)
    return jax.nn.softmax(logits, axis=-1)                                # (B, M) f32


# ---------------------------------------------------------------------------
# Tiling helpers
# ---------------------------------------------------------------------------
def _vmem_capacity_bytes():
    """Physical VMEM of the running TPU generation; conservative 64 MiB fallback
    (v7x) so a failed query never over-budgets."""
    try:
        return int(pltpu.get_tpu_info().vmem_capacity_bytes)
    except Exception:
        return 64 * 1024 * 1024


def _choose_row_tile(R, bytes_per_row, target_bytes, batch, align):
    """Rows per Phase-B tile: multiple of `align` (native sublane packing for the
    dtype) unless it is the full extent, sized so the short_memory tile stays
    under `target_bytes`, and split so the grid has >= 2 steps (v7x megacore)."""
    budget_rows = max(1, target_bytes // bytes_per_row)
    if budget_rows >= R:
        tR = R                                        # whole extent fits the budget
    else:
        tR = max(align, (budget_rows // align) * align)
    # Keep at least two total grid steps so both v7x TensorCores get work.
    if batch == 1 and tR >= R and R > align:
        tR = max(align, (R // 2) // align * align)
    return min(tR, R)


# ---------------------------------------------------------------------------
# Wrapper
# ---------------------------------------------------------------------------
def memory_attention(encoder_output, decoder_output, short_memory, w, b):
    B, S, D = encoder_output.shape
    M = b.shape[0]
    assert short_memory.shape == (B, M, S, D)
    assert w.shape == (M, 2 * D)

    # ---- Phase A (plain JAX, negligible work) ----
    alpha = _attention_weights(encoder_output, decoder_output, w, b)      # (B, M) f32
    alpha_flat = alpha.reshape(B * M)                                     # 1-D -> cheap SMEM

    # Output dtype follows JAX/torch promotion (f32 alpha * native short_memory).
    out_dtype = jnp.result_type(short_memory.dtype, jnp.float32)

    # ---- Lane-dense layout: flatten (S, D) into (R, 128) when possible ----
    C = S * D
    if C % 128 == 0:
        Lw = 128
        R = C // 128
        sm_in = short_memory.reshape(B, M, R, Lw)     # contiguous (free) reshape
    else:
        # S*D not 128-aligned: keep the native layout; last dim = full D is legal
        # (stores may be masked, but correctness is unaffected).
        Lw = D
        R = S
        sm_in = short_memory

    sm_itemsize = jnp.dtype(short_memory.dtype).itemsize
    out_itemsize = jnp.dtype(out_dtype).itemsize
    align = 8 * max(1, 4 // sm_itemsize)              # f32: 8, bf16: 16, int8/fp8: 32

    vmem_cap = _vmem_capacity_bytes()
    target_sm_tile = min(8 * 1024 * 1024, vmem_cap // 8)      # ~8 MiB streaming tiles
    tR = _choose_row_tile(R, M * Lw * sm_itemsize, target_sm_tile, B, align)

    # VMEM budget: 2x sm tile + 2x out tile + f32 intermediates, clamped to the
    # physical capacity of this generation (v7x: 64 MiB).
    sm_tile_bytes = M * tR * Lw * sm_itemsize
    out_tile_bytes = tR * Lw * out_itemsize
    acc_bytes = tR * Lw * 4
    needed = 2 * sm_tile_bytes + 2 * out_tile_bytes + 4 * acc_bytes + (2 << 20)
    vmem_limit = int(min(max(needed, 32 << 20), int(vmem_cap * 0.75)))

    grid = (B, pl.cdiv(R, tR))

    out_flat = pl.pallas_call(
        weighted_sum_kernel,
        out_shape=jax.ShapeDtypeStruct((B, R, Lw), out_dtype),
        grid=grid,
        in_specs=[
            # alpha: whole (B*M,) f32 array in SMEM, read as scalars in-kernel.
            pl.BlockSpec(memory_space=pltpu.MemorySpace.SMEM),
            # short_memory: streamed lane-dense tiles in its native dtype.
            pl.BlockSpec((1, M, tR, Lw), lambda bi, ci: (bi, 0, ci, 0)),
        ],
        out_specs=pl.BlockSpec((1, tR, Lw), lambda bi, ci: (bi, ci, 0)),
        compiler_params=pltpu.CompilerParams(
            dimension_semantics=("parallel", "parallel"),
            vmem_limit_bytes=vmem_limit),
    )(alpha_flat, sm_in)

    return out_flat.reshape(B, S, D)


# ---------------------------------------------------------------------------
# Pure-JAX reference (matches the torch module)
# ---------------------------------------------------------------------------
def memory_attention_ref(enc, dec, sm, w, b):
    combined = jnp.concatenate([enc, dec], axis=2) @ w.T + b    # (B, S, M)
    alpha = jax.nn.softmax(jnp.mean(combined, axis=1), axis=1)  # (B, M)
    weighted = sm * alpha[:, :, None, None]                     # (B, M, S, D)
    return jnp.sum(weighted, axis=1)                            # (B, S, D)


if __name__ == "__main__":
    # Small shapes consistent with the module's forward.
    B, S, D, M = 2, 8, 32, 5   # batch, seq, dim_model, memory_size

    key = jax.random.PRNGKey(0)
    k_enc, k_dec, k_sm, k_w, k_b = jax.random.split(key, 5)

    encoder_output = jax.random.normal(k_enc, (B, S, D), jnp.float32)
    decoder_output = jax.random.normal(k_dec, (B, S, D), jnp.float32)
    short_memory = jax.random.normal(k_sm, (B, M, S, D), jnp.float32)

    # Deterministic Linear parameters (same shapes as torch.nn.Linear(2*D, M)).
    bound = 1.0 / np.sqrt(2 * D)
    w = jax.random.uniform(k_w, (M, 2 * D), jnp.float32, -bound, bound)
    b = jax.random.uniform(k_b, (M,), jnp.float32, -bound, bound)

    out = memory_attention(encoder_output, decoder_output, short_memory, w, b)
    out = jax.block_until_ready(out)

    ref = memory_attention_ref(encoder_output, decoder_output, short_memory, w, b)
    np.testing.assert_allclose(np.asarray(out), np.asarray(ref),
                               rtol=1e-5, atol=1e-5)

    print("KERNEL_OK")
</pallas_src>

<mosaic_0001>
module attributes {stable_mosaic.version = 11 : i64} {
  func.func @weighted_sum_kernel(%arg0: i32, %arg1: i32, %arg2: memref<10xf32, #tpu.memory_space<smem>>, %arg3: memref<1x5x2x128xf32, #tpu.memory_space<vmem>>, %arg4: memref<1x2x128xf32, #tpu.memory_space<vmem>>) attributes {dimension_semantics = [#tpu.dimension_semantics<parallel>, #tpu.dimension_semantics<parallel>], iteration_bounds = array<i64: 2, 1>, scalar_prefetch = 0 : i64, scratch_operands = 0 : i64, tpu.core_type = #tpu.core_type<tc>, window_params = [{transform_indices = @transform_0, window_bounds = array<i64: 10>}, {transform_indices = @transform_1, window_bounds = array<i64: 1, 5, 2, 128>}, {transform_indices = @transform_2, window_bounds = array<i64: 1, 2, 128>}]} {
    %c5_i32 = arith.constant 5 : i32
    %0 = arith.muli %arg0, %c5_i32 : i32
    %c0 = arith.constant 0 : index
    %c0_0 = arith.constant 0 : index
    %c0_1 = arith.constant 0 : index
    %c0_2 = arith.constant 0 : index
    %1 = vector.load %arg3[%c0, %c0_0, %c0_1, %c0_2] : memref<1x5x2x128xf32, #tpu.memory_space<vmem>>, vector<1x1x2x128xf32>
    %2 = vector.shape_cast %1 : vector<1x1x2x128xf32> to vector<2x128xf32>
    %3 = arith.index_cast %0 : i32 to index
    %4 = memref.load %arg2[%3] : memref<10xf32, #tpu.memory_space<smem>>
    %5 = vector.broadcast %4 : f32 to vector<2x128xf32>
    %6 = arith.mulf %2, %5 : vector<2x128xf32>
    %c0_3 = arith.constant 0 : index
    %c1 = arith.constant 1 : index
    %c0_4 = arith.constant 0 : index
    %c0_5 = arith.constant 0 : index
    %7 = vector.load %arg3[%c0_3, %c1, %c0_4, %c0_5] : memref<1x5x2x128xf32, #tpu.memory_space<vmem>>, vector<1x1x2x128xf32>
    %8 = vector.shape_cast %7 : vector<1x1x2x128xf32> to vector<2x128xf32>
    %c1_i32 = arith.constant 1 : i32
    %9 = arith.addi %0, %c1_i32 : i32
    %10 = arith.index_cast %9 : i32 to index
    %11 = memref.load %arg2[%10] : memref<10xf32, #tpu.memory_space<smem>>
    %12 = vector.broadcast %11 : f32 to vector<2x128xf32>
    %13 = arith.mulf %8, %12 : vector<2x128xf32>
    %14 = arith.addf %6, %13 : vector<2x128xf32>
    %c0_6 = arith.constant 0 : index
    %c2 = arith.constant 2 : index
    %c0_7 = arith.constant 0 : index
    %c0_8 = arith.constant 0 : index
    %15 = vector.load %arg3[%c0_6, %c2, %c0_7, %c0_8] : memref<1x5x2x128xf32, #tpu.memory_space<vmem>>, vector<1x1x2x128xf32>
    %16 = vector.shape_cast %15 : vector<1x1x2x128xf32> to vector<2x128xf32>
    %c2_i32 = arith.constant 2 : i32
    %17 = arith.addi %0, %c2_i32 : i32
    %18 = arith.index_cast %17 : i32 to index
    %19 = memref.load %arg2[%18] : memref<10xf32, #tpu.memory_space<smem>>
    %20 = vector.broadcast %19 : f32 to vector<2x128xf32>
    %21 = arith.mulf %16, %20 : vector<2x128xf32>
    %22 = arith.addf %14, %21 : vector<2x128xf32>
    %c0_9 = arith.constant 0 : index
    %c3 = arith.constant 3 : index
    %c0_10 = arith.constant 0 : index
    %c0_11 = arith.constant 0 : index
    %23 = vector.load %arg3[%c0_9, %c3, %c0_10, %c0_11] : memref<1x5x2x128xf32, #tpu.memory_space<vmem>>, vector<1x1x2x128xf32>
    %24 = vector.shape_cast %23 : vector<1x1x2x128xf32> to vector<2x128xf32>
    %c3_i32 = arith.constant 3 : i32
    %25 = arith.addi %0, %c3_i32 : i32
    %26 = arith.index_cast %25 : i32 to index
    %27 = memref.load %arg2[%26] : memref<10xf32, #tpu.memory_space<smem>>
    %28 = vector.broadcast %27 : f32 to vector<2x128xf32>
    %29 = arith.mulf %24, %28 : vector<2x128xf32>
    %30 = arith.addf %22, %29 : vector<2x128xf32>
    %c0_12 = arith.constant 0 : index
    %c4 = arith.constant 4 : index
    %c0_13 = arith.constant 0 : index
    %c0_14 = arith.constant 0 : index
    %31 = vector.load %arg3[%c0_12, %c4, %c0_13, %c0_14] : memref<1x5x2x128xf32, #tpu.memory_space<vmem>>, vector<1x1x2x128xf32>
    %32 = vector.shape_cast %31 : vector<1x1x2x128xf32> to vector<2x128xf32>
    %c4_i32 = arith.constant 4 : i32
    %33 = arith.addi %0, %c4_i32 : i32
    %34 = arith.index_cast %33 : i32 to index
    %35 = memref.load %arg2[%34] : memref<10xf32, #tpu.memory_space<smem>>
    %36 = vector.broadcast %35 : f32 to vector<2x128xf32>
    %37 = arith.mulf %32, %36 : vector<2x128xf32>
    %38 = arith.addf %30, %37 : vector<2x128xf32>
    %c0_15 = arith.constant 0 : index
    %c0_16 = arith.constant 0 : index
    %c0_17 = arith.constant 0 : index
    %39 = vector.load %arg4[%c0_15, %c0_16, %c0_17] : memref<1x2x128xf32, #tpu.memory_space<vmem>>, vector<1x2x128xf32>
    %40 = vector.shape_cast %39 : vector<1x2x128xf32> to vector<2x128xf32>
    %41 = vector.shape_cast %38 : vector<2x128xf32> to vector<1x2x128xf32>
    tpu.vector_store %arg4[%c0_15, %c0_16, %c0_17], %41 {strides = array<i32>} : memref<1x2x128xf32, #tpu.memory_space<vmem>>, vector<1x2x128xf32>,
    return
  }
  func.func @transform_0(%arg0: i32, %arg1: i32) -> i32 {
    %c0_i32 = arith.constant 0 : i32
    %c0_i32_0 = arith.constant 0 : i32
    return %c0_i32 : i32
  }
  func.func @transform_1(%arg0: i32, %arg1: i32) -> (i32, i32, i32, i32) {
    %c0_i32 = arith.constant 0 : i32
    %c0_i32_0 = arith.constant 0 : i32
    %c0_i32_1 = arith.constant 0 : i32
    return %arg0, %c0_i32, %arg1, %c0_i32_0 : i32, i32, i32, i32
  }
  func.func @transform_2(%arg0: i32, %arg1: i32) -> (i32, i32, i32) {
    %c0_i32 = arith.constant 0 : i32
    %c0_i32_0 = arith.constant 0 : i32
    return %arg0, %arg1, %c0_i32 : i32, i32, i32
  }
}

</mosaic_0001>

<llo_original>
// kernel: tpu_custom_call.1
$region0: #{tpu_custom_call.1}
  #allocation0 [shape = 'u32[]', space=smem, size = 0x4, offset = 0x4, fixed_abs, tag = 'smem constant byte address 0x4 - core index']
  #allocation1 [shape = 'u32[144,128]{1,0:T(1,128)}', space=vmem, size = 0x12000, scoped, tag = 'internal scratch']
  %s0 = inlined_call_operand.hbm [shape: f32[10], index: 0, kind: input, shape index: {}]
  %s1 = inlined_call_operand.hbm [shape: f32[2,5,2,128], index: 1, kind: input, shape index: {}]
  %s2 = inlined_call_operand.hbm [shape: f32[2,2,128], index: 2, kind: output, shape index: {}]
  %s3 = sld [smem:[#allocation0]]
  $region49: #{tpu_custom_call.1} parent=0
    _
  %s5 = ssub.s32 1, %s3
  %s6 = scalar_select 0, %s5, %s3
  $region1: #{tpu_custom_call.1} parent=0
    #allocation2 [shape = 'u8[512]{0}', space=smem, size = 0x200, scoped, tag = 'input window, operand 0, single buffered']
    #allocation3 [shape = 's32[2]{0}', space=sflag, size = 0x8, scoped, tag = 'scoped memory for tpu_custom_call.1']
    #allocation4 [shape = 's32[2]{0}', space=sflag, size = 0x8, scoped, tag = 'scoped memory for tpu_custom_call.1']
    #allocation5 [shape = 's32[2]{0}', space=sflag, size = 0x8, scoped, tag = 'scoped memory for tpu_custom_call.1']
    #allocation6 [shape = 'u8[10240]{0}', space=vmem, size = 0x2800, scoped, tag = 'input window, operand 1']
    #allocation7 [shape = 'u8[2048]{0}', space=vmem, size = 0x800, scoped, tag = 'output window, operand 0']
    %7 = vsyncpa [#allocation5], 0
    %8 = vsyncpa [#allocation3], 0
    %s9 = scalar_lea.sflag [#allocation3], 1
    %10 = vsyncpa %s9, 0
    %11 = vsyncpa [#allocation4], 0
    %s12 = scalar_lea.sflag [#allocation4], 1
    %13 = vsyncpa %s12, 0
    loop: start=0, step=1, limit=4
    $region2: #{tpu_custom_call.1} parent=1 // loop_pre_header
      _
    $region3: #{tpu_custom_call.1} parent=1 // loop_header
      %s15 = sphi 0, %s19
      %p16 = scmp.ge.s32.totalorder %s15, 4
      %s22 = sphi 0, %s34
      %s23 = sphi 0, %s30
      %s24 = sphi 0, %s22
      %s25 = sphi 0, %s23
      %s26 = sphi 0, %s24
      %s27 = sphi 0, %s25
      %s35 = sphi 0, %s35
      %s37 = sphi 0, %s35
      %s38 = sphi 0, %s37
      %s52 = sphi 0, %s38
      %s60 = sphi 0, %s62
      %s63 = sphi 0, %s60
      %s64 = sphi 0, %s63
      %s80 = sphi 0, %s64
      %s88 = sphi 0, %s90
      %s91 = sphi 0, %s88
      %s92 = sphi 0, %s91
      %s108 = sphi 0, %s92
    $region4: #{tpu_custom_call.1} parent=1 // loop_header_branch
      %18 = sbr.rel (%p16) target = $region8
    $region5: #{tpu_custom_call.1} parent=1 // loop_body
      %s20 = ssub.s32 %s15, 1
      %s21 = ssub.s32 %s15, 2
      %s28 = sadd.s32 1, %s23
      %p29 = scmp.ge.s32.totalorder %s28, 1
      %s30 = scalar_select %p29, 0, %s28
      %s31 = sadd.s32 1, %s22
      %s32 = scalar_select %p29, %s31, %s22
      %p33 = scmp.ge.s32.totalorder %s32, 2
      %s34 = scalar_select %p33, 0, %s32
      %s36 = sadd.s32 %s35, 1
      %p39 = scmp.eq.s32.totalorder %s15, 1
      %p40 = scmp.ne.s32.totalorder %s35, %s37
      %p41 = scmp.eq.s32.totalorder %s15, 0
      %p42 = por %p40, %p41
      %p43 = scmp.ne.s32.totalorder %s35, %s37
      %p44 = scmp.eq.s32.totalorder %s20, 1
      %p45 = por %p43, %p44
      %p46 = scmp.ne.s32.totalorder %s37, %s38
      %p47 = scmp.eq.s32.totalorder %s20, 0
      %p48 = por %p46, %p47
      %p49 = scmp.ne.s32.totalorder %s37, %s38
      %p50 = scmp.eq.s32.totalorder %s21, 1
      %p51 = por %p49, %p50
      %p53 = scmp.ne.s32.totalorder %s38, %s52
      %p54 = scmp.eq.s32.totalorder %s21, 0
      %p55 = por %p53, %p54
      %s56 = ssub.s32 %s22, %s34
      %s57 = ssub.s32 %s23, %s30
      %s58 = sor.u32 %s56, %s57
      %p59 = scmp.eq.s32.totalorder %s58, 0
      %s61 = sadd.s32 %s60, 1
      %s62 = scalar_select %p59, %s60, %s61
      %p65 = pneg %p59
      %p66 = scmp.eq.s32.totalorder %s15, 1
      %p67 = por %p65, %p66
      %p68 = scmp.ne.s32.totalorder %s60, %s63
      %p69 = scmp.eq.s32.totalorder %s15, 0
      %p70 = por %p68, %p69
      %p71 = scmp.ne.s32.totalorder %s60, %s63
      %p72 = scmp.eq.s32.totalorder %s20, 1
      %p73 = por %p71, %p72
      %p74 = scmp.ne.s32.totalorder %s63, %s64
      %p75 = scmp.eq.s32.totalorder %s20, 0
      %p76 = por %p74, %p75
      %p77 = scmp.ne.s32.totalorder %s63, %s64
      %p78 = scmp.eq.s32.totalorder %s21, 1
      %p79 = por %p77, %p78
      %p81 = scmp.ne.s32.totalorder %s64, %s80
      %p82 = scmp.eq.s32.totalorder %s21, 0
      %p83 = por %p81, %p82
      %s84 = ssub.s32 %s22, %s34
      %s85 = ssub.s32 %s23, %s30
      %s86 = sor.u32 %s84, %s85
      %p87 = scmp.eq.s32.totalorder %s86, 0
      %s89 = sadd.s32 %s88, 1
      %s90 = scalar_select %p87, %s88, %s89
      %p93 = pneg %p87
      %p94 = scmp.eq.s32.totalorder %s15, 1
      %p95 = por %p93, %p94
      %p96 = scmp.ne.s32.totalorder %s88, %s91
      %p97 = scmp.eq.s32.totalorder %s15, 0
      %p98 = por %p96, %p97
      %p99 = scmp.ne.s32.totalorder %s88, %s91
      %p100 = scmp.eq.s32.totalorder %s20, 1
      %p101 = por %p99, %p100
      %p102 = scmp.ne.s32.totalorder %s91, %s92
      %p103 = scmp.eq.s32.totalorder %s20, 0
      %p104 = por %p102, %p103
      %p105 = scmp.ne.s32.totalorder %s91, %s92
      %p106 = scmp.eq.s32.totalorder %s21, 1
      %p107 = por %p105, %p106
      %p109 = scmp.ne.s32.totalorder %s92, %s108
      %p110 = scmp.eq.s32.totalorder %s21, 0
      %p111 = por %p109, %p110
      %p112 = scmp.le.s32.totalorder 1, %s15
      %p113 = scmp.lt.s32.totalorder %s15, 3
      %p114 = pnand %p112, %p113
      %p115 = pneg %p114
      // Predicated region
      $region9: #{tpu_custom_call.1} parent=5 // pred_check
        _
      $region10: #{tpu_custom_call.1} parent=5 // pred_check_branch
        %117 = sbr.rel (%p114) target = $region12
      $region11: #{tpu_custom_call.1} parent=5 // pred_region
        %s118 = ssub.s32 %s15, 1
        // Predicated region
        $region13: #{tpu_custom_call.1} parent=11 // pred_check
          %p119 = pneg %p48
        $region14: #{tpu_custom_call.1} parent=11 // pred_check_branch
          %121 = sbr.rel (%p119) target = $region16
        $region15: #{tpu_custom_call.1} parent=11 // pred_region
          %s123 = ssub.s32 16, 16
          %124 = vsyncadd [#allocation5], %s123
          %127 = dma.hbm_to_smem %s0, 16, [#allocation2], [#allocation5]
        $region16: #{tpu_custom_call.1} parent=11 // pred_fallthru
          _
      $region12: #{tpu_custom_call.1} parent=5 // pred_fallthru
        _
      %p128 = scmp.lt.s32.totalorder %s15, 2
      // Predicated region
      $region17: #{tpu_custom_call.1} parent=5 // pred_check
        %p129 = pneg %p128
      $region18: #{tpu_custom_call.1} parent=5 // pred_check_branch
        %131 = sbr.rel (%p129) target = $region20
      $region19: #{tpu_custom_call.1} parent=5 // pred_region
        // Predicated region
        $region21: #{tpu_custom_call.1} parent=19 // pred_check
          %p132 = pneg %p70
        $region22: #{tpu_custom_call.1} parent=19 // pred_check_branch
          %134 = sbr.rel (%p132) target = $region24
        $region23: #{tpu_custom_call.1} parent=19 // pred_region
          %s135 = sand.u32 %s60, 1
          %s136 = scalar_lea.sflag [#allocation3], %s135
          %s137 = sand.u32 %s60, 1
          %s138 = smul.addr %s137, 10
          %s139 = scalar_lea.vmem [#allocation6], %s138
          %s141 = ssub.s32 160, 160
          %142 = vsyncadd %s136, %s141
          %s143 = smul.addr %s22, 5
          %s144 = sadd.s32 %s23, %s143
          %s145 = smul.addr %s144, 32
          %s146 = scalar_lea.hbm %s1, %s145
          %s147 = sshll.u32 %s139, 4
          %s148 = int_to_ptr.vmem [resolvable:$true] %s147
          %153 = dma.hbm_to_vmem [thread:$0]  %s146, 160, %s148, %s136, 32, 32, 2
        $region24: #{tpu_custom_call.1} parent=19 // pred_fallthru
          _
      $region20: #{tpu_custom_call.1} parent=5 // pred_fallthru
        _
      %p154 = scmp.le.s32.totalorder 1, %s15
      %p155 = scmp.lt.s32.totalorder %s15, 3
      %p156 = pnand %p154, %p155
      %p157 = pneg %p156
      // Predicated region
      $region25: #{tpu_custom_call.1} parent=5 // pred_check
        _
      $region26: #{tpu_custom_call.1} parent=5 // pred_check_branch
        %159 = sbr.rel (%p156) target = $region28
      $region27: #{tpu_custom_call.1} parent=5 // pred_region
        %s160 = ssub.s32 %s15, 1
        // Predicated region
        $region29: #{tpu_custom_call.1} parent=27 // pred_check
          %p161 = pneg %p48
        $region30: #{tpu_custom_call.1} parent=27 // pred_check_branch
          %163 = sbr.rel (%p161) target = $region32
        $region31: #{tpu_custom_call.1} parent=27 // pred_region
          %164 = dma.done [#allocation5], 16
        $region32: #{tpu_custom_call.1} parent=27 // pred_fallthru
          _
        %s165 = sand.u32 %s63, 1
        %s166 = scalar_lea.sflag [#allocation3], %s165
        %s167 = sand.u32 %s63, 1
        %s168 = smul.addr %s167, 10
        %s169 = scalar_lea.vmem [#allocation6], %s168
        // Predicated region
        $region33: #{tpu_custom_call.1} parent=27 // pred_check
          %p170 = pneg %p76
        $region34: #{tpu_custom_call.1} parent=27 // pred_check_branch
          %172 = sbr.rel (%p170) target = $region36
        $region35: #{tpu_custom_call.1} parent=27 // pred_region
          %173 = dma.done %s166, 160
        $region36: #{tpu_custom_call.1} parent=27 // pred_fallthru
          _
        %174 = sfence
        %p175 = pneg %p48
        %p176 = pneg %p45
        %s177 = sand.u32 %s63, 1
        %s178 = scalar_lea.sflag [#allocation3], %s177
        %s179 = sand.u32 %s63, 1
        %s180 = smul.addr %s179, 10
        %s181 = scalar_lea.vmem [#allocation6], %s180
        %p182 = pneg %p76
        %p183 = pneg %p73
        %p184 = pneg %p104
        %p185 = pneg %p101
        %s186 = sand.u32 %s91, 1
        %s187 = scalar_lea.sflag [#allocation4], %s186
        %s188 = sand.u32 %s91, 1
        %s189 = smul.addr %s188, 2
        %s190 = scalar_lea.vmem [#allocation7], %s189
        %s191 = smul.u32 %s24, 5
        %v192 = vld [vmem:[%s169] sm:$0x3]
        %s193 = sld [smem:[#allocation2 + %s191]]
        %v194 = vstv %s193
        %v195 = vmul.f32 %v192, %v194
        %s196 = scalar_lea.vmem %s169, 2 [#allocation6]
        %v197 = vld [vmem:[%s196] sm:$0x3]
        %s198 = sadd.s32 %s191, 1
        %s199 = sld [smem:[#allocation2 + %s198]]
        %v200 = vstv %s199
        %v201 = vmul.f32 %v197, %v200
        %v202 = vadd.f32 %v195, %v201
        %s203 = scalar_lea.vmem %s169, 4 [#allocation6]
        %v204 = vld [vmem:[%s203] sm:$0x3]
        %s205 = sadd.s32 %s191, 2
        %s206 = sld [smem:[#allocation2 + %s205]]
        %v207 = vstv %s206
        %v208 = vmul.f32 %v204, %v207
        %v209 = vadd.f32 %v202, %v208
        %s210 = scalar_lea.vmem %s169, 6 [#allocation6]
        %v211 = vld [vmem:[%s210] sm:$0x3]
        %s212 = sadd.s32 %s191, 3
        %s213 = sld [smem:[#allocation2 + %s212]]
        %v214 = vstv %s213
        %v215 = vmul.f32 %v211, %v214
        %v216 = vadd.f32 %v209, %v215
        %s217 = scalar_lea.vmem %s169, 8 [#allocation6]
        %v218 = vld [vmem:[%s217] sm:$0x3]
        %s219 = sadd.s32 %s191, 4
        %s220 = sld [smem:[#allocation2 + %s219]]
        %v221 = vstv %s220
        %v222 = vmul.f32 %v218, %v221
        %v223 = vadd.f32 %v216, %v222
        %224 = vst [vmem:[%s190] sm:$0x3] %v223
        %s225 = sand.u32 %s91, 1
        %s226 = scalar_lea.sflag [#allocation4], %s225
        %s227 = sand.u32 %s91, 1
        %s228 = smul.addr %s227, 2
        %s229 = scalar_lea.vmem [#allocation7], %s228
        // Predicated region
        $region37: #{tpu_custom_call.1} parent=27 // pred_check
          %p230 = pneg %p101
        $region38: #{tpu_custom_call.1} parent=27 // pred_check_branch
          %232 = sbr.rel (%p230) target = $region40
        $region39: #{tpu_custom_call.1} parent=27 // pred_region
          %s234 = ssub.s32 32, 32
          %235 = vsyncadd %s226, %s234
          %s236 = sadd.s32 %s25, %s24
          %s237 = smul.addr %s236, 32
          %s238 = scalar_lea.hbm %s2, %s237
          %s240 = sshll.u32 %s229, 4
          %s241 = int_to_ptr.vmem [resolvable:$true] %s240
          %243 = dma.vmem_to_hbm [thread:$0]  %s241, 32, %s238, %s226
        $region40: #{tpu_custom_call.1} parent=27 // pred_fallthru
          _
      $region28: #{tpu_custom_call.1} parent=5 // pred_fallthru
        _
      %p244 = scmp.le.s32.totalorder 2, %s15
      // Predicated region
      $region41: #{tpu_custom_call.1} parent=5 // pred_check
        %p245 = pneg %p244
      $region42: #{tpu_custom_call.1} parent=5 // pred_check_branch
        %247 = sbr.rel (%p245) target = $region44
      $region43: #{tpu_custom_call.1} parent=5 // pred_region
        %s248 = ssub.s32 %s15, 2
        // Predicated region
        $region45: #{tpu_custom_call.1} parent=43 // pred_check
          %p249 = pneg %p107
        $region46: #{tpu_custom_call.1} parent=43 // pred_check_branch
          %251 = sbr.rel (%p249) target = $region48
        $region47: #{tpu_custom_call.1} parent=43 // pred_region
          %s252 = sand.u32 %s92, 1
          %s253 = scalar_lea.sflag [#allocation4], %s252
          %s254 = sand.u32 %s92, 1
          %s255 = smul.addr %s254, 2
          %s256 = scalar_lea.vmem [#allocation7], %s255
          %257 = dma.done %s253, 32
        $region48: #{tpu_custom_call.1} parent=43 // pred_fallthru
          _
      $region44: #{tpu_custom_call.1} parent=5 // pred_fallthru
        _
    $region6: #{tpu_custom_call.1} parent=1 // loop_footer
      %s19 = sadd.s32 1, %s15
    $region7: #{tpu_custom_call.1} parent=1 // loop_footer_branch
      %14 = sbr.rel target = $region3
    $region8: #{tpu_custom_call.1} parent=1 // loop_exit
      _
    %258 = vsyncpa [#allocation3], 1
    %s259 = scalar_lea.sflag [#allocation3], 1
    %260 = vsyncpa %s259, 1
    %261 = vsyncpa [#allocation4], 1
    %s262 = scalar_lea.sflag [#allocation4], 1
    %263 = vsyncpa %s262, 1
    %264 = vsyncpa [#allocation5], 1
    %s265 = scalar_lea.sflag [#allocation5], 1
    %266 = vsyncpa %s265, 1

</llo_original>
